<compile_context>
chip_gen: v7x
topology: tpu7x:2x2x1
jax: 0.10.0
libtpu: 0.0.40
codegen_flags: <defaults>
</compile_context>

<pallas_src>
import math
from functools import partial

import jax
import jax.numpy as jnp
from jax.experimental import pallas as pl
from jax.experimental.pallas import tpu as pltpu

LANE = 128  # TPU vreg lane width


def linear_kernel(x_ref, w_ref, b_ref, o_ref):
    # Entire (padded) problem lives in VMEM: (B,512) @ (512,128) + (1,128) -> (B,128).
    # Single MXU matmul with f32 accumulation, broadcast bias add, dense lane-wide store.
    o_ref[...] = (
        jnp.dot(x_ref[...], w_ref[...], preferred_element_type=jnp.float32)
        + b_ref[...]
    ).astype(o_ref.dtype)


def init_padded_params(key, K=512, N=3, lane=LANE):
    """One-time parameter init + lane padding (done once, NOT per forward call)."""
    bound = 1.0 / math.sqrt(K)  # mimic PyTorch Linear's U(-1/sqrt(K), 1/sqrt(K))
    k_w, k_b = jax.random.split(key)
    w = jax.random.uniform(k_w, (K, N), jnp.float32, -bound, bound)  # (in, out) layout
    b = jax.random.uniform(k_b, (1, N), jnp.float32, -bound, bound)

    Np = ((N + lane - 1) // lane) * lane
    w_p = jnp.zeros((K, Np), jnp.float32).at[:, :N].set(w)
    b_p = jnp.zeros((1, Np), jnp.float32).at[:, :N].set(b)
    return w, b, w_p, b_p


@partial(jax.jit, static_argnames=("n_out",))
def linear_pallas(x, w_p, b_p, n_out=3):
    """x: (B, K) f32, w_p: (K, Np) f32 pre-padded, b_p: (1, Np) f32 pre-padded -> (B, n_out)."""
    B, K = x.shape
    Kp, Np = w_p.shape
    assert K == Kp and b_p.shape == (1, Np) and n_out <= Np

    out_p = pl.pallas_call(
        linear_kernel,
        out_shape=jax.ShapeDtypeStruct((B, Np), x.dtype),
        in_specs=[
            pl.BlockSpec(memory_space=pltpu.MemorySpace.VMEM),
            pl.BlockSpec(memory_space=pltpu.MemorySpace.VMEM),
            pl.BlockSpec(memory_space=pltpu.MemorySpace.VMEM),
        ],
        out_specs=pl.BlockSpec(memory_space=pltpu.MemorySpace.VMEM),
        cost_estimate=pl.CostEstimate(
            flops=2 * B * K * Np,
            bytes_accessed=(B * K + K * Np + Np + B * Np) * 4,
            transcendentals=0,
        ),
    )(x, w_p, b_p)

    # Slice the padded lanes off inside the jit (fuses away; drop entirely if the
    # consumer can read the 128-wide padded slab).
    return out_p[:, :n_out]


if __name__ == "__main__":
    key = jax.random.PRNGKey(0)
    k_x, k_param = jax.random.split(key)

    B, K, N = 8, 512, 3  # batch of image features (multiple of 8), nn.Linear(512, 3)

    # Init-time (one-off) parameter creation and lane padding.
    w, b, w_p, b_p = init_padded_params(k_param, K=K, N=N)

    x = jax.random.normal(k_x, (B, K), jnp.float32)

    out = linear_pallas(x, w_p, b_p, n_out=N)
    out = jax.block_until_ready(out)

    # Reference check in plain JAX.
    ref = x @ w + b
    assert out.shape == (B, N)
    assert jnp.allclose(out, ref, atol=1e-5, rtol=1e-5)

    print("KERNEL_OK")
</pallas_src>

<mosaic_0001>
module attributes {stable_mosaic.version = 11 : i64} {
  func.func @linear_kernel(%arg0: memref<8x512xf32, #tpu.memory_space<vmem>>, %arg1: memref<512x128xf32, #tpu.memory_space<vmem>>, %arg2: memref<1x128xf32, #tpu.memory_space<vmem>>, %arg3: memref<8x128xf32, #tpu.memory_space<vmem>>) attributes {dimension_semantics = [], scalar_prefetch = 0 : i64, scratch_operands = 0 : i64, tpu.core_type = #tpu.core_type<tc>} {
    %c0 = arith.constant 0 : index
    %c0_0 = arith.constant 0 : index
    %0 = vector.load %arg0[%c0, %c0_0] : memref<8x512xf32, #tpu.memory_space<vmem>>, vector<8x512xf32>
    %c0_1 = arith.constant 0 : index
    %c0_2 = arith.constant 0 : index
    %1 = vector.load %arg1[%c0_1, %c0_2] : memref<512x128xf32, #tpu.memory_space<vmem>>, vector<512x128xf32>
    %cst = arith.constant dense<0.000000e+00> : vector<8x128xf32>
    %2 = tpu.matmul %0, %1, %cst {dimension_numbers = #tpu.dot_dimension_numbers<[1], [0], [0], [1], [0, 0, 1, 1], [], []>} : vector<8x512xf32>, vector<512x128xf32>, vector<8x128xf32> -> vector<8x128xf32>
    %c0_3 = arith.constant 0 : index
    %c0_4 = arith.constant 0 : index
    %3 = vector.load %arg2[%c0_3, %c0_4] : memref<1x128xf32, #tpu.memory_space<vmem>>, vector<1x128xf32>
    %4 = vector.broadcast %3 : vector<1x128xf32> to vector<8x128xf32>
    %5 = arith.addf %2, %4 : vector<8x128xf32>
    %c0_5 = arith.constant 0 : index
    %c0_6 = arith.constant 0 : index
    %6 = vector.load %arg3[%c0_5, %c0_6] : memref<8x128xf32, #tpu.memory_space<vmem>>, vector<8x128xf32>
    tpu.vector_store %arg3[%c0_5, %c0_6], %5 {strides = array<i32>} : memref<8x128xf32, #tpu.memory_space<vmem>>, vector<8x128xf32>,
    return
  }
}

</mosaic_0001>

<llo_original>
// kernel: linear_pallas.1
$region0: #{linear_pallas.1}
  #allocation0 [shape = 'u32[]', space=smem, size = 0x4, offset = 0x4, fixed_abs, tag = 'smem constant byte address 0x4 - core index']
  #allocation1 [shape = 'u32[144,128]{1,0:T(1,128)}', space=vmem, size = 0x12000, scoped, tag = 'internal scratch']
  %s0 = inlined_call_operand.hbm [shape: f32[8,512], index: 0, kind: input, shape index: {}]
  %s1 = inlined_call_operand.hbm [shape: f32[512,128], index: 1, kind: input, shape index: {}]
  %s2 = inlined_call_operand.vmem [shape: f32[1,128], index: 2, kind: input, shape index: {}]
  %s3 = inlined_call_operand.vmem [shape: f32[8,128], index: 3, kind: output, shape index: {}]
  %s4 = sld [smem:[#allocation0]]
  $region30: #{linear_pallas.1} parent=0
    _
  %s6 = ssub.s32 1, %s4
  %s7 = scalar_select 0, %s6, %s4
  $region1: #{linear_pallas.1} parent=0
    #allocation2 [shape = 'u8[16384]{0}', space=vmem, size = 0x4000, scoped, tag = 'input window, operand 0, single buffered']
    #allocation3 [shape = 's32[1]{0}', space=sflag, size = 0x4, scoped, tag = 'scoped memory for linear_pallas.1']
    #allocation4 [shape = 'u8[262144]{0}', space=vmem, size = 0x40000, scoped, tag = 'input window, operand 1, single buffered']
    #allocation5 [shape = 's32[1]{0}', space=sflag, size = 0x4, scoped, tag = 'scoped memory for linear_pallas.1']
    %8 = vsyncpa [#allocation3], 0
    %9 = vsyncpa [#allocation5], 0
    // Predicated region
    $region2: #{linear_pallas.1} parent=1 // pred_check
      _
    $region3: #{linear_pallas.1} parent=1 // pred_check_branch
      %11 = sbr.rel (0) target = $region5
    $region4: #{linear_pallas.1} parent=1 // pred_region
      %s13 = ssub.s32 512, 512
      %14 = vsyncadd [#allocation3], %s13
      %s16 = sshll.u32 [#allocation2], 4
      %s17 = int_to_ptr.vmem [resolvable:$true] %s16
      %19 = dma.hbm_to_vmem [thread:$0]  %s0, 512, %s17, [#allocation3]
    $region5: #{linear_pallas.1} parent=1 // pred_fallthru
      _
    // Predicated region
    $region6: #{linear_pallas.1} parent=1 // pred_check
      _
    $region7: #{linear_pallas.1} parent=1 // pred_check_branch
      %21 = sbr.rel (0) target = $region9
    $region8: #{linear_pallas.1} parent=1 // pred_region
      %s23 = ssub.s32 8192, 8192
      %24 = vsyncadd [#allocation5], %s23
      %s25 = sshll.u32 [#allocation4], 4
      %s26 = int_to_ptr.vmem [resolvable:$true] %s25
      %31 = dma.hbm_to_vmem [thread:$0]  %s1, 8192, %s26, [#allocation5], 128, 128, 8
    $region9: #{linear_pallas.1} parent=1 // pred_fallthru
      _
    // Predicated region
    $region10: #{linear_pallas.1} parent=1 // pred_check
      _
    $region11: #{linear_pallas.1} parent=1 // pred_check_branch
      %33 = sbr.rel (0) target = $region13
    $region12: #{linear_pallas.1} parent=1 // pred_region
      _
    $region13: #{linear_pallas.1} parent=1 // pred_fallthru
      _
    // Predicated region
    $region14: #{linear_pallas.1} parent=1 // pred_check
      _
    $region15: #{linear_pallas.1} parent=1 // pred_check_branch
      %35 = sbr.rel (0) target = $region17
    $region16: #{linear_pallas.1} parent=1 // pred_region
      %36 = dma.done [#allocation3], 512
    $region17: #{linear_pallas.1} parent=1 // pred_fallthru
      _
    // Predicated region
    $region18: #{linear_pallas.1} parent=1 // pred_check
      _
    $region19: #{linear_pallas.1} parent=1 // pred_check_branch
      %38 = sbr.rel (0) target = $region21
    $region20: #{linear_pallas.1} parent=1 // pred_region
      %39 = dma.done [#allocation5], 8192
    $region21: #{linear_pallas.1} parent=1 // pred_fallthru
      _
    %v40 = vld [vmem:[#allocation2] sm:$0xff]
    %v41 = vld [vmem:[#allocation2 + $0x8] sm:$0xff]
    %v42 = vld [vmem:[#allocation2 + $0x10] sm:$0xff]
    %v43 = vld [vmem:[#allocation2 + $0x18] sm:$0xff]
    %v44 = vld [vmem:[#allocation4] sm:$0xff]
    %v45 = vld [vmem:[#allocation4 + $0x8] sm:$0xff]
    %v46 = vld [vmem:[#allocation4 + $0x10] sm:$0xff]
    %v47 = vld [vmem:[#allocation4 + $0x18] sm:$0xff]
    %v48 = vld [vmem:[#allocation4 + $0x20] sm:$0xff]
    %v49 = vld [vmem:[#allocation4 + $0x28] sm:$0xff]
    %v50 = vld [vmem:[#allocation4 + $0x30] sm:$0xff]
    %v51 = vld [vmem:[#allocation4 + $0x38] sm:$0xff]
    %v52 = vld [vmem:[#allocation4 + $0x40] sm:$0xff]
    %v53 = vld [vmem:[#allocation4 + $0x48] sm:$0xff]
    %v54 = vld [vmem:[#allocation4 + $0x50] sm:$0xff]
    %v55 = vld [vmem:[#allocation4 + $0x58] sm:$0xff]
    %v56 = vld [vmem:[#allocation4 + $0x60] sm:$0xff]
    %v57 = vld [vmem:[#allocation4 + $0x68] sm:$0xff]
    %v58 = vld [vmem:[#allocation4 + $0x70] sm:$0xff]
    %v59 = vld [vmem:[#allocation4 + $0x78] sm:$0xff]
    %v60 = vld [vmem:[#allocation4 + $0x80] sm:$0xff]
    %v61 = vld [vmem:[#allocation4 + $0x88] sm:$0xff]
    %v62 = vld [vmem:[#allocation4 + $0x90] sm:$0xff]
    %v63 = vld [vmem:[#allocation4 + $0x98] sm:$0xff]
    %v64 = vld [vmem:[#allocation4 + $0xa0] sm:$0xff]
    %v65 = vld [vmem:[#allocation4 + $0xa8] sm:$0xff]
    %v66 = vld [vmem:[#allocation4 + $0xb0] sm:$0xff]
    %v67 = vld [vmem:[#allocation4 + $0xb8] sm:$0xff]
    %v68 = vld [vmem:[#allocation4 + $0xc0] sm:$0xff]
    %v69 = vld [vmem:[#allocation4 + $0xc8] sm:$0xff]
    %v70 = vld [vmem:[#allocation4 + $0xd0] sm:$0xff]
    %v71 = vld [vmem:[#allocation4 + $0xd8] sm:$0xff]
    %v72 = vld [vmem:[#allocation4 + $0xe0] sm:$0xff]
    %v73 = vld [vmem:[#allocation4 + $0xe8] sm:$0xff]
    %v74 = vld [vmem:[#allocation4 + $0xf0] sm:$0xff]
    %v75 = vld [vmem:[#allocation4 + $0xf8] sm:$0xff]
    %v76 = vld [vmem:[#allocation4 + $0x100] sm:$0xff]
    %v77 = vld [vmem:[#allocation4 + $0x108] sm:$0xff]
    %v78 = vld [vmem:[#allocation4 + $0x110] sm:$0xff]
    %v79 = vld [vmem:[#allocation4 + $0x118] sm:$0xff]
    %v80 = vld [vmem:[#allocation4 + $0x120] sm:$0xff]
    %v81 = vld [vmem:[#allocation4 + $0x128] sm:$0xff]
    %v82 = vld [vmem:[#allocation4 + $0x130] sm:$0xff]
    %v83 = vld [vmem:[#allocation4 + $0x138] sm:$0xff]
    %v84 = vld [vmem:[#allocation4 + $0x140] sm:$0xff]
    %v85 = vld [vmem:[#allocation4 + $0x148] sm:$0xff]
    %v86 = vld [vmem:[#allocation4 + $0x150] sm:$0xff]
    %v87 = vld [vmem:[#allocation4 + $0x158] sm:$0xff]
    %v88 = vld [vmem:[#allocation4 + $0x160] sm:$0xff]
    %v89 = vld [vmem:[#allocation4 + $0x168] sm:$0xff]
    %v90 = vld [vmem:[#allocation4 + $0x170] sm:$0xff]
    %v91 = vld [vmem:[#allocation4 + $0x178] sm:$0xff]
    %v92 = vld [vmem:[#allocation4 + $0x180] sm:$0xff]
    %v93 = vld [vmem:[#allocation4 + $0x188] sm:$0xff]
    %v94 = vld [vmem:[#allocation4 + $0x190] sm:$0xff]
    %v95 = vld [vmem:[#allocation4 + $0x198] sm:$0xff]
    %v96 = vld [vmem:[#allocation4 + $0x1a0] sm:$0xff]
    %v97 = vld [vmem:[#allocation4 + $0x1a8] sm:$0xff]
    %v98 = vld [vmem:[#allocation4 + $0x1b0] sm:$0xff]
    %v99 = vld [vmem:[#allocation4 + $0x1b8] sm:$0xff]
    %v100 = vld [vmem:[#allocation4 + $0x1c0] sm:$0xff]
    %v101 = vld [vmem:[#allocation4 + $0x1c8] sm:$0xff]
    %v102 = vld [vmem:[#allocation4 + $0x1d0] sm:$0xff]
    %v103 = vld [vmem:[#allocation4 + $0x1d8] sm:$0xff]
    %v104 = vld [vmem:[#allocation4 + $0x1e0] sm:$0xff]
    %v105 = vld [vmem:[#allocation4 + $0x1e8] sm:$0xff]
    %v106 = vld [vmem:[#allocation4 + $0x1f0] sm:$0xff]
    %v107 = vld [vmem:[#allocation4 + $0x1f8] sm:$0xff]
    %v108 = vld [vmem:[%s2] sm:$0x1]
    %v110 = vlaneseq
    %v111 = vshrl.u32 %v110, 7
    %v112 = vsub.s32 0, %v111
    %v113 = vrot.slane %v108, %v112
    %115 = vmatprep.subr.mxu0 0.0
    %116 = vmatpush1.msra.mxu0 %v44
    %117 = vmatprep.subr.mxu0 0.0
    %118 = vmatpush1.msra.mxu0 %v45
    %119 = vmatprep.subr.mxu0 0.0
    %120 = vmatpush1.msra.mxu0 %v46
    %121 = vmatprep.subr.mxu0 0.0
    %122 = vmatpush1.msra.mxu0 %v47
    %123 = vmatprep.subr.mxu0 0.0
    %124 = vmatpush1.msra.mxu0 %v48
    %125 = vmatprep.subr.mxu0 0.0
    %126 = vmatpush1.msra.mxu0 %v49
    %127 = vmatprep.subr.mxu0 0.0
    %128 = vmatpush1.msra.mxu0 %v50
    %129 = vmatprep.subr.mxu0 0.0
    %130 = vmatpush1.msra.mxu0 %v51
    %131 = vmatprep.subr.mxu0 0.0
    %132 = vmatpush1.msra.mxu0 %v52
    %133 = vmatprep.subr.mxu0 0.0
    %134 = vmatpush1.msra.mxu0 %v53
    %135 = vmatprep.subr.mxu0 0.0
    %136 = vmatpush1.msra.mxu0 %v54
    %137 = vmatprep.subr.mxu0 0.0
    %138 = vmatpush1.msra.mxu0 %v55
    %139 = vmatprep.subr.mxu0 0.0
    %140 = vmatpush1.msra.mxu0 %v56
    %141 = vmatprep.subr.mxu0 0.0
    %142 = vmatpush1.msra.mxu0 %v57
    %143 = vmatprep.subr.mxu0 0.0
    %144 = vmatpush1.msra.mxu0 %v58
    %145 = vmatprep.subr.mxu0 0.0
    %146 = vmatpush1.msra.mxu0 %v59
    %147 = vmatprep.subr.mxu0 0.0
    %148 = vmatpush1.msra.mxu0 %v60
    %149 = vmatprep.subr.mxu0 0.0
    %150 = vmatpush1.msra.mxu0 %v61
    %151 = vmatprep.subr.mxu0 0.0
    %152 = vmatpush1.msra.mxu0 %v62
    %153 = vmatprep.subr.mxu0 0.0
    %154 = vmatpush1.msra.mxu0 %v63
    %155 = vmatprep.subr.mxu0 0.0
    %156 = vmatpush1.msra.mxu0 %v64
    %157 = vmatprep.subr.mxu0 0.0
    %158 = vmatpush1.msra.mxu0 %v65
    %159 = vmatprep.subr.mxu0 0.0
    %160 = vmatpush1.msra.mxu0 %v66
    %161 = vmatprep.subr.mxu0 0.0
    %162 = vmatpush1.msra.mxu0 %v67
    %163 = vmatprep.subr.mxu0 0.0
    %164 = vmatpush1.msra.mxu0 %v68
    %165 = vmatprep.subr.mxu0 0.0
    %166 = vmatpush1.msra.mxu0 %v69
    %167 = vmatprep.subr.mxu0 0.0
    %168 = vmatpush1.msra.mxu0 %v70
    %169 = vmatprep.subr.mxu0 0.0
    %170 = vmatpush1.msra.mxu0 %v71
    %171 = vmatprep.subr.mxu0 0.0
    %172 = vmatpush1.msra.mxu0 %v72
    %173 = vmatprep.subr.mxu0 0.0
    %174 = vmatpush1.msra.mxu0 %v73
    %175 = vmatprep.subr.mxu0 0.0
    %176 = vmatpush1.msra.mxu0 %v74
    %177 = vmatprep.subr.mxu0 0.0
    %178 = vmatpush1.msra.mxu0 %v75
    %179 = vmatprep.mubr.f32.mxu0 %v41
    %180 = vmatmul.mubr.f32.gmra.mrb[0].mxu0 %v40
    %v181 = vpop.f32.mrb[0].mxu0
    %v182 = vadd.f32 %v113, %v181
    %v183 = vpop.f32.mrb[0].mxu0
    %184 = vdwg.mxu0
    %185 = vmatprep.subr.mxu0 0.0
    %186 = vmatpush1.msra.mxu0 %v76
    %187 = vmatprep.subr.mxu0 0.0
    %188 = vmatpush1.msra.mxu0 %v77
    %189 = vmatprep.subr.mxu0 0.0
    %190 = vmatpush1.msra.mxu0 %v78
    %191 = vmatprep.subr.mxu0 0.0
    %192 = vmatpush1.msra.mxu0 %v79
    %193 = vmatprep.subr.mxu0 0.0
    %194 = vmatpush1.msra.mxu0 %v80
    %195 = vmatprep.subr.mxu0 0.0
    %196 = vmatpush1.msra.mxu0 %v81
    %197 = vmatprep.subr.mxu0 0.0
    %198 = vmatpush1.msra.mxu0 %v82
    %199 = vmatprep.subr.mxu0 0.0
    %200 = vmatpush1.msra.mxu0 %v83
    %201 = vmatprep.subr.mxu0 0.0
    %202 = vmatpush1.msra.mxu0 %v84
    %203 = vmatprep.subr.mxu0 0.0
    %204 = vmatpush1.msra.mxu0 %v85
    %205 = vmatprep.subr.mxu0 0.0
    %206 = vmatpush1.msra.mxu0 %v86
    %207 = vmatprep.subr.mxu0 0.0
    %208 = vmatpush1.msra.mxu0 %v87
    %209 = vmatprep.subr.mxu0 0.0
    %210 = vmatpush1.msra.mxu0 %v88
    %211 = vmatprep.subr.mxu0 0.0
    %212 = vmatpush1.msra.mxu0 %v89
    %213 = vmatprep.subr.mxu0 0.0
    %214 = vmatpush1.msra.mxu0 %v90
    %215 = vmatprep.subr.mxu0 0.0
    %216 = vmatpush1.msra.mxu0 %v91
    %217 = vmatprep.subr.mxu0 0.0
    %218 = vmatpush1.msra.mxu0 %v92
    %219 = vmatprep.subr.mxu0 0.0
    %220 = vmatpush1.msra.mxu0 %v93
    %221 = vmatprep.subr.mxu0 0.0
    %222 = vmatpush1.msra.mxu0 %v94
    %223 = vmatprep.subr.mxu0 0.0
    %224 = vmatpush1.msra.mxu0 %v95
    %225 = vmatprep.subr.mxu0 0.0
    %226 = vmatpush1.msra.mxu0 %v96
    %227 = vmatprep.subr.mxu0 0.0
    %228 = vmatpush1.msra.mxu0 %v97
    %229 = vmatprep.subr.mxu0 0.0
    %230 = vmatpush1.msra.mxu0 %v98
    %231 = vmatprep.subr.mxu0 0.0
    %232 = vmatpush1.msra.mxu0 %v99
    %233 = vmatprep.subr.mxu0 0.0
    %234 = vmatpush1.msra.mxu0 %v100
    %235 = vmatprep.subr.mxu0 0.0
    %236 = vmatpush1.msra.mxu0 %v101
    %237 = vmatprep.subr.mxu0 0.0
    %238 = vmatpush1.msra.mxu0 %v102
    %239 = vmatprep.subr.mxu0 0.0
    %240 = vmatpush1.msra.mxu0 %v103
    %241 = vmatprep.subr.mxu0 0.0
    %242 = vmatpush1.msra.mxu0 %v104
    %243 = vmatprep.subr.mxu0 0.0
    %244 = vmatpush1.msra.mxu0 %v105
    %245 = vmatprep.subr.mxu0 0.0
    %246 = vmatpush1.msra.mxu0 %v106
    %247 = vmatprep.subr.mxu0 0.0
    %248 = vmatpush1.msra.mxu0 %v107
    %249 = vmatprep.mubr.f32.mxu0 %v43
    %250 = vmatmul.mubr.f32.gmra.mrb[0].mxu0 %v42
    %v251 = vpop.f32.mrb[0].mxu0
    %v252 = vadd.f32 %v182, %v251
    %v253 = vpop.f32.mrb[0].mxu0
    %254 = vdwg.mxu0
    %255 = vst [vmem:[%s3] sm:$0xff] %v252
    // Predicated region
    $region22: #{linear_pallas.1} parent=1 // pred_check
      _
    $region23: #{linear_pallas.1} parent=1 // pred_check_branch
      %257 = sbr.rel (0) target = $region25
    $region24: #{linear_pallas.1} parent=1 // pred_region
      _
    $region25: #{linear_pallas.1} parent=1 // pred_fallthru
      _
    // Predicated region
    $region26: #{linear_pallas.1} parent=1 // pred_check
      _
    $region27: #{linear_pallas.1} parent=1 // pred_check_branch
      %259 = sbr.rel (0) target = $region29
    $region28: #{linear_pallas.1} parent=1 // pred_region
      _
    $region29: #{linear_pallas.1} parent=1 // pred_fallthru
      _
    %260 = vsyncpa [#allocation3], 1
    %261 = vsyncpa [#allocation5], 1

</llo_original>
